<compile_context>
chip_gen: v5e
topology: v5e:2x2
jax: 0.10.0
libtpu: 0.0.40
codegen_flags: <defaults>
</compile_context>

<pallas_src>
import functools

import jax
import jax.numpy as jnp
import numpy as np
from jax.experimental import pallas as pl
from jax.experimental.pallas import tpu as pltpu

HIDDEN = 256
_ROW_ALIGN = 16            # bf16 sublane tile; keeps in-kernel reshapes/slices aligned
_MIN_ROWS_PER_CORE = 256   # don't split across TensorCores below this per-core size
_VMEM_LIMIT = 32 * 1024 * 1024


def _round_up(x, m):
    return -(-x // m) * m


@functools.lru_cache(maxsize=None)
def _num_tensorcores():
    """v7x has 2 TensorCores per chip; v5e/v6e have 1.  Default to 1 if unknown."""
    try:
        kind = jax.devices()[0].device_kind.lower()
    except Exception:
        return 1
    return 2 if ("v7" in kind or "7x" in kind) else 1


def _grid_and_tile(batch, tb_max, n_cores):
    """Pick (num_tiles, tile_rows).  Single tile whenever the batch fits; only
    split across the grid when tb_max is exceeded or (on multi-TC chips) when
    each core still gets a decent amount of work.  Rows are 16-aligned only."""
    b_al = _round_up(batch, _ROW_ALIGN)
    if b_al <= tb_max:
        if n_cores > 1 and b_al >= n_cores * _MIN_ROWS_PER_CORE:
            num_tiles = n_cores
        else:
            return 1, b_al
    else:
        num_tiles = -(-b_al // tb_max)
        if n_cores > 1:
            num_tiles = _round_up(num_tiles, n_cores)
    tb = _round_up(-(-b_al // num_tiles), _ROW_ALIGN)
    return num_tiles, tb


# --------------------------------------------------------------------------- #
# Kernels
# --------------------------------------------------------------------------- #

def _qfunc_kernel_single(x_ref, w1_ref, b1_ref, w2_ref, b2_ref, w3_ref, b3_ref,
                         o_ref):
    # x: (tb, obs_dim+act_dim) bf16; weights bf16; biases f32; out (tb, 1) f32.
    h1 = jnp.dot(x_ref[...], w1_ref[...],
                 preferred_element_type=jnp.float32) + b1_ref[...]
    h1 = jnp.maximum(h1, 0.0)
    h2 = jnp.dot(h1.astype(jnp.bfloat16), w2_ref[...],
                 preferred_element_type=jnp.float32) + b2_ref[...]
    h2 = jnp.maximum(h2, 0.0)
    q = jnp.dot(h2.astype(jnp.bfloat16), w3_ref[...],
                preferred_element_type=jnp.float32) + b3_ref[...]
    o_ref[...] = q.astype(o_ref.dtype)


def _qfunc_kernel_multi(obs_ref, act_ref, w1o_ref, w1a_ref, b1_ref, w2_ref,
                        b2_ref, w3_ref, b3_ref, o_ref, *, n_actions, act_dim):
    # obs: (tb, obs_dim) bf16; act: (n_actions, tb, act_dim) bf16;
    # out: (tb, n_actions) f32.  z_obs is computed once and reused for every
    # action slot; layers 2/3 run once on the stacked (n_actions*tb, 256) block.
    tb = obs_ref.shape[0]
    z_obs = jnp.dot(obs_ref[...], w1o_ref[...],
                    preferred_element_type=jnp.float32) + b1_ref[...]
    a_all = act_ref[...].reshape(n_actions * tb, act_dim)          # aligned merge
    z_act = jnp.dot(a_all, w1a_ref[...], preferred_element_type=jnp.float32)
    h1 = jnp.maximum(z_act.reshape(n_actions, tb, HIDDEN) + z_obs[None], 0.0)
    h1 = h1.reshape(n_actions * tb, HIDDEN)
    h2 = jnp.dot(h1.astype(jnp.bfloat16), w2_ref[...],
                 preferred_element_type=jnp.float32) + b2_ref[...]
    h2 = jnp.maximum(h2, 0.0)
    q = jnp.dot(h2.astype(jnp.bfloat16), w3_ref[...],
                preferred_element_type=jnp.float32) + b3_ref[...]  # (n*tb, 1)
    # Re-pack the per-action columns into one (tb, n_actions) block, single store.
    cols = [q[k * tb:(k + 1) * tb, :] for k in range(n_actions)]
    o_ref[...] = jnp.concatenate(cols, axis=1).astype(o_ref.dtype)


# --------------------------------------------------------------------------- #
# Wrappers
# --------------------------------------------------------------------------- #

_WEIGHT_SPEC = lambda shape: pl.BlockSpec(shape, lambda i: tuple(0 for _ in shape))


@functools.partial(jax.jit, static_argnames=("tb_max",))
def _q_single(obs, act, w1, b1, w2, b2, w3, b3, *, tb_max=2048):
    """Single-action path.  Returns q of shape (B,)."""
    B = obs.shape[0]
    d_in = obs.shape[1] + act.shape[1]
    # One fused copy: concat + cast to bf16 (halves the kernel's input DMA).
    x = jnp.concatenate([obs, act], axis=-1).astype(jnp.bfloat16)
    num_tiles, tb = _grid_and_tile(B, tb_max, _num_tensorcores())
    Bp = num_tiles * tb
    if Bp != B:
        x = jnp.pad(x, ((0, Bp - B), (0, 0)))

    out = pl.pallas_call(
        _qfunc_kernel_single,
        out_shape=jax.ShapeDtypeStruct((Bp, 1), jnp.float32),
        grid_spec=pltpu.PrefetchScalarGridSpec(
            num_scalar_prefetch=0,
            grid=(num_tiles,),
            in_specs=[
                pl.BlockSpec((tb, d_in), lambda i: (i, 0)),     # x
                pl.BlockSpec((d_in, HIDDEN), lambda i: (0, 0)), # W1
                pl.BlockSpec((1, HIDDEN), lambda i: (0, 0)),    # b1
                pl.BlockSpec((HIDDEN, HIDDEN), lambda i: (0, 0)),  # W2
                pl.BlockSpec((1, HIDDEN), lambda i: (0, 0)),    # b2
                pl.BlockSpec((HIDDEN, 1), lambda i: (0, 0)),    # W3 column
                pl.BlockSpec((1, 1), lambda i: (0, 0)),         # b3
            ],
            out_specs=pl.BlockSpec((tb, 1), lambda i: (i, 0)),
        ),
        compiler_params=pltpu.CompilerParams(
            # TODO(synk): on v7x verify the batch axis is actually sharded across
            # both TensorCores; if not, switch to pltpu.CORE_PARALLEL here.
            dimension_semantics=("parallel",),
            vmem_limit_bytes=_VMEM_LIMIT),
    )(x, w1, b1, w2, b2, w3, b3)
    return out[:B, 0]


@functools.partial(jax.jit, static_argnames=("tb_max",))
def _q_multi(obs, act, w1, b1, w2, b2, w3, b3, *, tb_max=2048):
    """Multiple-actions path.  obs (B, obs_dim); act (B, n_actions, act_dim).
    Returns q of shape (B, n_actions)."""
    B, obs_dim = obs.shape
    n_actions, act_dim = act.shape[1], act.shape[2]
    obs_b = obs.astype(jnp.bfloat16)
    act_b = jnp.transpose(act, (1, 0, 2)).astype(jnp.bfloat16)   # (n, B, d), fused cast
    w1o, w1a = w1[:obs_dim], w1[obs_dim:]

    # Budget rows so the stacked (n_actions * tb) intermediates stay ~tb_max rows.
    tb_rows = max(_ROW_ALIGN, tb_max // n_actions)
    num_tiles, tb = _grid_and_tile(B, tb_rows, _num_tensorcores())
    Bp = num_tiles * tb
    if Bp != B:
        obs_b = jnp.pad(obs_b, ((0, Bp - B), (0, 0)))
        act_b = jnp.pad(act_b, ((0, 0), (0, Bp - B), (0, 0)))

    kernel = functools.partial(_qfunc_kernel_multi, n_actions=n_actions,
                               act_dim=act_dim)
    out = pl.pallas_call(
        kernel,
        out_shape=jax.ShapeDtypeStruct((Bp, n_actions), jnp.float32),
        grid_spec=pltpu.PrefetchScalarGridSpec(
            num_scalar_prefetch=0,
            grid=(num_tiles,),
            in_specs=[
                pl.BlockSpec((tb, obs_dim), lambda i: (i, 0)),              # obs
                pl.BlockSpec((n_actions, tb, act_dim), lambda i: (0, i, 0)),# act
                pl.BlockSpec((obs_dim, HIDDEN), lambda i: (0, 0)),          # W1_obs
                pl.BlockSpec((act_dim, HIDDEN), lambda i: (0, 0)),          # W1_act
                pl.BlockSpec((1, HIDDEN), lambda i: (0, 0)),                # b1
                pl.BlockSpec((HIDDEN, HIDDEN), lambda i: (0, 0)),           # W2
                pl.BlockSpec((1, HIDDEN), lambda i: (0, 0)),                # b2
                pl.BlockSpec((HIDDEN, 1), lambda i: (0, 0)),                # W3 column
                pl.BlockSpec((1, 1), lambda i: (0, 0)),                     # b3
            ],
            out_specs=pl.BlockSpec((tb, n_actions), lambda i: (i, 0)),
        ),
        compiler_params=pltpu.CompilerParams(
            dimension_semantics=("parallel",),
            vmem_limit_bytes=_VMEM_LIMIT),
    )(obs_b, act_b, w1o, w1a, b1, w2, b2, w3, b3)
    return out[:B]


def fully_connected_q_function(observations, actions, params, tb_max=2048):
    """Matches FullyConnectedQFunction.forward semantics."""
    obs = jnp.asarray(observations)
    act = jnp.asarray(actions)
    if act.ndim == 3 and obs.ndim == 2:
        return _q_multi(obs, act, *params, tb_max=tb_max)    # (B, n_actions)
    return _q_single(obs, act, *params, tb_max=tb_max)       # (B,)


# --------------------------------------------------------------------------- #
# Parameter init (mirrors the PyTorch module with orthogonal_init=False)
# --------------------------------------------------------------------------- #

def init_params(key, observation_dim, action_dim):
    """Hidden layers: PyTorch default Linear init (uniform +-1/sqrt(fan_in)).
    Output layer weight: xavier_uniform with gain=0.01 (init_module_weights);
    output bias keeps the PyTorch default.  Weights stored transposed (in, out)
    and cast to bf16 for the MXU; biases stay f32."""
    d_in = observation_dim + action_dim
    k = jax.random.split(key, 6)

    def uni(kk, shape, bound):
        return jax.random.uniform(kk, shape, jnp.float32, -bound, bound)

    b1d = 1.0 / np.sqrt(d_in)
    w1 = uni(k[0], (d_in, HIDDEN), b1d)
    b1 = uni(k[1], (1, HIDDEN), b1d)
    b2d = 1.0 / np.sqrt(HIDDEN)
    w2 = uni(k[2], (HIDDEN, HIDDEN), b2d)
    b2 = uni(k[3], (1, HIDDEN), b2d)
    xb = 0.01 * np.sqrt(6.0 / (HIDDEN + 1))     # xavier_uniform, gain=0.01
    w3 = uni(k[4], (HIDDEN, 1), xb)             # stored as a (256, 1) column
    b3 = uni(k[5], (1, 1), b2d)
    return (w1.astype(jnp.bfloat16), b1,
            w2.astype(jnp.bfloat16), b2,
            w3.astype(jnp.bfloat16), b3)


def _reference(observations, actions, params):
    """Pure-JAX f32 reference of FullyConnectedQFunction.forward."""
    w1, b1, w2, b2, w3, b3 = params
    w1f, w2f, w3f = (w.astype(jnp.float32) for w in (w1, w2, w3))
    batch_size = observations.shape[0]
    multiple_actions = actions.ndim == 3 and observations.ndim == 2
    if multiple_actions:
        n = actions.shape[1]
        observations = jnp.broadcast_to(
            observations[:, None, :], (batch_size, n, observations.shape[-1])
        ).reshape(-1, observations.shape[-1])
        actions = actions.reshape(-1, actions.shape[-1])
    x = jnp.concatenate([observations, actions], axis=-1).astype(jnp.float32)
    h = jnp.maximum(x @ w1f + b1, 0.0)
    h = jnp.maximum(h @ w2f + b2, 0.0)
    q = (h @ w3f + b3)[:, 0]
    if multiple_actions:
        q = q.reshape(batch_size, -1)
    return q


if __name__ == "__main__":
    obs_dim, act_dim = 16, 8
    batch = 2

    key = jax.random.PRNGKey(0)
    kp, ko, ka, ka3, kb1, kb2 = jax.random.split(key, 6)

    params = init_params(kp, obs_dim, act_dim)
    observations = jax.random.normal(ko, (batch, obs_dim), jnp.float32)
    actions = jax.random.normal(ka, (batch, act_dim), jnp.float32)
    actions3 = jax.random.normal(ka3, (batch, 5, act_dim), jnp.float32)

    # bf16 MXU operands -> compare against the f32 reference with loose tolerance.
    RTOL, ATOL = 2e-2, 5e-3

    # 2-D actions path: output shape (batch,)
    q = jax.block_until_ready(fully_connected_q_function(observations, actions, params))
    q_ref = _reference(observations, actions, params)
    assert q.shape == (batch,)
    np.testing.assert_allclose(np.asarray(q), np.asarray(q_ref), rtol=RTOL, atol=ATOL)

    # 3-D actions path: output shape (batch, n_actions)
    q3 = jax.block_until_ready(fully_connected_q_function(observations, actions3, params))
    q3_ref = _reference(observations, actions3, params)
    assert q3.shape == (batch, 5)
    np.testing.assert_allclose(np.asarray(q3), np.asarray(q3_ref), rtol=RTOL, atol=ATOL)

    # Larger, non-16-aligned batch: single-tile path (pads only to 304 rows).
    obs_big = jax.random.normal(kb1, (300, obs_dim), jnp.float32)
    act_big = jax.random.normal(kb2, (300, act_dim), jnp.float32)
    qb = jax.block_until_ready(fully_connected_q_function(obs_big, act_big, params))
    qb_ref = _reference(obs_big, act_big, params)
    assert qb.shape == (300,)
    np.testing.assert_allclose(np.asarray(qb), np.asarray(qb_ref), rtol=RTOL, atol=ATOL)

    # Force the multi-tile (grid > 1) paths on both kernels with a small tb_max.
    qs = jax.block_until_ready(_q_single(obs_big, act_big, *params, tb_max=128))
    np.testing.assert_allclose(np.asarray(qs), np.asarray(qb_ref), rtol=RTOL, atol=ATOL)

    act_big3 = jax.random.normal(ka3, (300, 5, act_dim), jnp.float32)
    qm = jax.block_until_ready(_q_multi(obs_big, act_big3, *params, tb_max=256))
    qm_ref = _reference(obs_big, act_big3, params)
    np.testing.assert_allclose(np.asarray(qm), np.asarray(qm_ref), rtol=RTOL, atol=ATOL)

    print("KERNEL_OK")
</pallas_src>

<mosaic_0001>
module attributes {stable_mosaic.version = 11 : i64} {
  func.func @_qfunc_kernel_single(%arg0: i32, %arg1: memref<16x24xbf16, #tpu.memory_space<vmem>>, %arg2: memref<24x256xbf16, #tpu.memory_space<vmem>>, %arg3: memref<1x256xf32, #tpu.memory_space<vmem>>, %arg4: memref<256x256xbf16, #tpu.memory_space<vmem>>, %arg5: memref<1x256xf32, #tpu.memory_space<vmem>>, %arg6: memref<256x1xbf16, #tpu.memory_space<vmem>>, %arg7: memref<1x1xf32, #tpu.memory_space<vmem>>, %arg8: memref<16x1xf32, #tpu.memory_space<vmem>>) attributes {dimension_semantics = [#tpu.dimension_semantics<parallel>], iteration_bounds = array<i64: 1>, scalar_prefetch = 0 : i64, scratch_operands = 0 : i64, tpu.core_type = #tpu.core_type<tc>, window_params = [{transform_indices = @transform_0, window_bounds = array<i64: 16, 24>}, {pipeline_mode = #tpu.pipeline_mode<synchronous>, transform_indices = @transform_1, window_bounds = array<i64: 24, 256>}, {pipeline_mode = #tpu.pipeline_mode<synchronous>, transform_indices = @transform_2, window_bounds = array<i64: 1, 256>}, {pipeline_mode = #tpu.pipeline_mode<synchronous>, transform_indices = @transform_3, window_bounds = array<i64: 256, 256>}, {pipeline_mode = #tpu.pipeline_mode<synchronous>, transform_indices = @transform_4, window_bounds = array<i64: 1, 256>}, {pipeline_mode = #tpu.pipeline_mode<synchronous>, transform_indices = @transform_5, window_bounds = array<i64: 256, 1>}, {pipeline_mode = #tpu.pipeline_mode<synchronous>, transform_indices = @transform_6, window_bounds = array<i64: 1, 1>}, {transform_indices = @transform_7, window_bounds = array<i64: 16, 1>}]} {
    %c0 = arith.constant 0 : index
    %c0_0 = arith.constant 0 : index
    %0 = vector.load %arg1[%c0, %c0_0] : memref<16x24xbf16, #tpu.memory_space<vmem>>, vector<16x24xbf16>
    %c0_1 = arith.constant 0 : index
    %c0_2 = arith.constant 0 : index
    %1 = vector.load %arg2[%c0_1, %c0_2] : memref<24x256xbf16, #tpu.memory_space<vmem>>, vector<24x256xbf16>
    %cst = arith.constant dense<0.000000e+00> : vector<16x256xf32>
    %2 = tpu.matmul %0, %1, %cst {dimension_numbers = #tpu.dot_dimension_numbers<[1], [0], [0], [1], [0, 0, 1, 1], [], []>} : vector<16x24xbf16>, vector<24x256xbf16>, vector<16x256xf32> -> vector<16x256xf32>
    %c0_3 = arith.constant 0 : index
    %c0_4 = arith.constant 0 : index
    %3 = vector.load %arg3[%c0_3, %c0_4] : memref<1x256xf32, #tpu.memory_space<vmem>>, vector<1x256xf32>
    %4 = vector.broadcast %3 : vector<1x256xf32> to vector<16x256xf32>
    %5 = arith.addf %2, %4 : vector<16x256xf32>
    %cst_5 = arith.constant 0.000000e+00 : f32
    %6 = vector.broadcast %cst_5 : f32 to vector<16x256xf32>
    %7 = arith.maximumf %5, %6 : vector<16x256xf32>
    %8 = arith.truncf %7 : vector<16x256xf32> to vector<16x256xbf16>
    %c0_6 = arith.constant 0 : index
    %c0_7 = arith.constant 0 : index
    %9 = vector.load %arg4[%c0_6, %c0_7] : memref<256x256xbf16, #tpu.memory_space<vmem>>, vector<256x256xbf16>
    %cst_8 = arith.constant dense<0.000000e+00> : vector<16x256xf32>
    %10 = tpu.matmul %8, %9, %cst_8 {dimension_numbers = #tpu.dot_dimension_numbers<[1], [0], [0], [1], [0, 0, 1, 1], [], []>} : vector<16x256xbf16>, vector<256x256xbf16>, vector<16x256xf32> -> vector<16x256xf32>
    %c0_9 = arith.constant 0 : index
    %c0_10 = arith.constant 0 : index
    %11 = vector.load %arg5[%c0_9, %c0_10] : memref<1x256xf32, #tpu.memory_space<vmem>>, vector<1x256xf32>
    %12 = vector.broadcast %11 : vector<1x256xf32> to vector<16x256xf32>
    %13 = arith.addf %10, %12 : vector<16x256xf32>
    %cst_11 = arith.constant 0.000000e+00 : f32
    %14 = vector.broadcast %cst_11 : f32 to vector<16x256xf32>
    %15 = arith.maximumf %13, %14 : vector<16x256xf32>
    %16 = arith.truncf %15 : vector<16x256xf32> to vector<16x256xbf16>
    %c0_12 = arith.constant 0 : index
    %c0_13 = arith.constant 0 : index
    %17 = vector.load %arg6[%c0_12, %c0_13] : memref<256x1xbf16, #tpu.memory_space<vmem>>, vector<256x1xbf16>
    %cst_14 = arith.constant dense<0.000000e+00> : vector<16x1xf32>
    %18 = tpu.matmul %16, %17, %cst_14 {dimension_numbers = #tpu.dot_dimension_numbers<[1], [0], [0], [1], [0, 0, 1, 1], [], []>} : vector<16x256xbf16>, vector<256x1xbf16>, vector<16x1xf32> -> vector<16x1xf32>
    %c0_15 = arith.constant 0 : index
    %c0_16 = arith.constant 0 : index
    %19 = vector.load %arg7[%c0_15, %c0_16] : memref<1x1xf32, #tpu.memory_space<vmem>>, vector<1x1xf32>
    %20 = vector.broadcast %19 : vector<1x1xf32> to vector<16x1xf32>
    %21 = arith.addf %18, %20 : vector<16x1xf32>
    %c0_17 = arith.constant 0 : index
    %c0_18 = arith.constant 0 : index
    %22 = vector.load %arg8[%c0_17, %c0_18] : memref<16x1xf32, #tpu.memory_space<vmem>>, vector<16x1xf32>
    tpu.vector_store %arg8[%c0_17, %c0_18], %21 {strides = array<i32>} : memref<16x1xf32, #tpu.memory_space<vmem>>, vector<16x1xf32>,
    return
  }
  func.func @transform_0(%arg0: i32) -> (i32, i32) {
    %c0_i32 = arith.constant 0 : i32
    %c0_i32_0 = arith.constant 0 : i32
    return %arg0, %c0_i32 : i32, i32
  }
  func.func @transform_1(%arg0: i32) -> (i32, i32) {
    %c0_i32 = arith.constant 0 : i32
    %c0_i32_0 = arith.constant 0 : i32
    %c0_i32_1 = arith.constant 0 : i32
    return %c0_i32, %c0_i32_0 : i32, i32
  }
  func.func @transform_2(%arg0: i32) -> (i32, i32) {
    %c0_i32 = arith.constant 0 : i32
    %c0_i32_0 = arith.constant 0 : i32
    %c0_i32_1 = arith.constant 0 : i32
    return %c0_i32, %c0_i32_0 : i32, i32
  }
  func.func @transform_3(%arg0: i32) -> (i32, i32) {
    %c0_i32 = arith.constant 0 : i32
    %c0_i32_0 = arith.constant 0 : i32
    %c0_i32_1 = arith.constant 0 : i32
    return %c0_i32, %c0_i32_0 : i32, i32
  }
  func.func @transform_4(%arg0: i32) -> (i32, i32) {
    %c0_i32 = arith.constant 0 : i32
    %c0_i32_0 = arith.constant 0 : i32
    %c0_i32_1 = arith.constant 0 : i32
    return %c0_i32, %c0_i32_0 : i32, i32
  }
  func.func @transform_5(%arg0: i32) -> (i32, i32) {
    %c0_i32 = arith.constant 0 : i32
    %c0_i32_0 = arith.constant 0 : i32
    %c0_i32_1 = arith.constant 0 : i32
    return %c0_i32, %c0_i32_0 : i32, i32
  }
  func.func @transform_6(%arg0: i32) -> (i32, i32) {
    %c0_i32 = arith.constant 0 : i32
    %c0_i32_0 = arith.constant 0 : i32
    %c0_i32_1 = arith.constant 0 : i32
    return %c0_i32, %c0_i32_0 : i32, i32
  }
  func.func @transform_7(%arg0: i32) -> (i32, i32) {
    %c0_i32 = arith.constant 0 : i32
    %c0_i32_0 = arith.constant 0 : i32
    return %arg0, %c0_i32 : i32, i32
  }
}

</mosaic_0001>

<llo_original>
// kernel: _q_single.1
$region0: #{_q_single.1}
  #allocation0 [shape = 'u32[]', space=smem, size = 0x4, offset = 0x4, fixed_abs, tag = 'smem constant byte address 0x4 - core index']
  #allocation1 [shape = 'u32[72,128]{1,0:T(1,128)}', space=vmem, size = 0x9000, scoped, tag = 'internal scratch']
  #allocation2 [shape = 'f32[1,1]{1,0:T(1,128)S(1)}', space=vmem, size = 0x200, scoped, tag = 'scoped memory for _q_single.1']
  %s0 = inlined_call_operand.vmem [shape: bf16[16,24], index: 0, kind: input, shape index: {}]
  %s1 = inlined_call_operand.vmem [shape: bf16[24,256], index: 1, kind: input, shape index: {}]
  %s2 = inlined_call_operand.vmem [shape: f32[1,256], index: 2, kind: input, shape index: {}]
  %s3 = inlined_call_operand.hbm [shape: bf16[256,256], index: 3, kind: input, shape index: {}]
  %s4 = inlined_call_operand.vmem [shape: f32[1,256], index: 4, kind: input, shape index: {}]
  %s5 = inlined_call_operand.vmem [shape: bf16[256,1], index: 5, kind: input, shape index: {}]
  %s6 = inlined_call_operand.<no memory space> [shape: f32[1,1], index: 6, kind: input, shape index: {}]
  %s7 = inlined_call_operand.vmem [shape: f32[16,1], index: 7, kind: output, shape index: {}]
  %s8 = sld [smem:[#allocation0]]
  $region42: #{_q_single.1} parent=0
    _
  %s10 = ssub.s32 1, %s8
  %s11 = scalar_select 0, %s10, %s8
  %v12 = vstv %s6
  %13 = vst [vmem:[#allocation2] sm:$0x1] %v12
  $region1: #{_q_single.1} parent=0
    #allocation3 [shape = 'u8[131072]{0}', space=vmem, size = 0x20000, scoped, tag = 'input window, operand 3, single buffered']
    #allocation4 [shape = 's32[1]{0}', space=sflag, size = 0x4, scoped, tag = 'scoped memory for _q_single.1']
    %14 = vsyncpa [#allocation4], 0
    // Predicated region
    $region2: #{_q_single.1} parent=1 // pred_check
      _
    $region3: #{_q_single.1} parent=1 // pred_check_branch
      %16 = sbr.rel (0) target = $region5
    $region4: #{_q_single.1} parent=1 // pred_region
      _
    $region5: #{_q_single.1} parent=1 // pred_fallthru
      _
    // Predicated region
    $region6: #{_q_single.1} parent=1 // pred_check
      _
    $region7: #{_q_single.1} parent=1 // pred_check_branch
      %18 = sbr.rel (0) target = $region9
    $region8: #{_q_single.1} parent=1 // pred_region
      _
    $region9: #{_q_single.1} parent=1 // pred_fallthru
      _
    // Predicated region
    $region10: #{_q_single.1} parent=1 // pred_check
      _
    $region11: #{_q_single.1} parent=1 // pred_check_branch
      %20 = sbr.rel (0) target = $region13
    $region12: #{_q_single.1} parent=1 // pred_region
      _
    $region13: #{_q_single.1} parent=1 // pred_fallthru
      _
    // Predicated region
    $region14: #{_q_single.1} parent=1 // pred_check
      _
    $region15: #{_q_single.1} parent=1 // pred_check_branch
      %22 = sbr.rel (0) target = $region17
    $region16: #{_q_single.1} parent=1 // pred_region
      %24 = vsyncadd [#allocation4], 0
      %s25 = sshll.u32 %s3, 4
      %s26 = int_to_ptr.hbm [resolvable:$true] %s25
      %s27 = sshll.u32 [#allocation3], 4
      %s28 = int_to_ptr.vmem [resolvable:$true] %s27
      %33 = dma.hbm_to_vmem [thread:$0]  %s26, 4096, %s28, [#allocation4], 128, 128, 8
    $region17: #{_q_single.1} parent=1 // pred_fallthru
      _
    // Predicated region
    $region18: #{_q_single.1} parent=1 // pred_check
      _
    $region19: #{_q_single.1} parent=1 // pred_check_branch
      %35 = sbr.rel (0) target = $region21
    $region20: #{_q_single.1} parent=1 // pred_region
      _
    $region21: #{_q_single.1} parent=1 // pred_fallthru
      _
    // Predicated region
    $region22: #{_q_single.1} parent=1 // pred_check
      _
    $region23: #{_q_single.1} parent=1 // pred_check_branch
      %37 = sbr.rel (0) target = $region25
    $region24: #{_q_single.1} parent=1 // pred_region
      _
    $region25: #{_q_single.1} parent=1 // pred_fallthru
      _
    // Predicated region
    $region26: #{_q_single.1} parent=1 // pred_check
      _
    $region27: #{_q_single.1} parent=1 // pred_check_branch
      %39 = sbr.rel (0) target = $region29
    $region28: #{_q_single.1} parent=1 // pred_region
      _
    $region29: #{_q_single.1} parent=1 // pred_fallthru
      _
    // Predicated region
    $region30: #{_q_single.1} parent=1 // pred_check
      _
    $region31: #{_q_single.1} parent=1 // pred_check_branch
      %41 = sbr.rel (0) target = $region33
    $region32: #{_q_single.1} parent=1 // pred_region
      %43 = dma.done [#allocation4], 4096
    $region33: #{_q_single.1} parent=1 // pred_fallthru
      _
    %v45 = vld [vmem:[%s0] sm:$0xf]
    %v46 = vld [vmem:[%s0 + $0x4] sm:$0xf]
    %v47 = vld [vmem:[%s1] sm:$0xff]
    %v48 = vld [vmem:[%s1 + $0x8] sm:$0xff]
    %v49 = vld [vmem:[%s1 + $0x10] sm:$0xff]
    %v50 = vld [vmem:[%s2] sm:$0x3]
    %v52 = vperm.slane %v50, 0
    %v53 = vperm.slane %v50, 1
    %v58 = vunpack.c.l.b16 %v45
    %v59 = vunpack.c.l.b16 %v46
    %v60 = vpack.c.b16 %v59, %v58
    %v64 = vunpack.c.l.b16 %v47
    %v65 = vunpack.c.h.b16 %v47
    %v66 = vunpack.c.l.b16 %v48
    %v67 = vunpack.c.h.b16 %v48
    %v68 = vunpack.c.l.b16 %v49
    %v69 = vunpack.c.h.b16 %v49
    %v70 = vpack.c.b16 %v66, %v64
    %v71 = vpack.c.b16 %v67, %v65
    %v72 = vpack.c.b16 %v68, %v68
    %v73 = vpack.c.b16 %v69, %v69
    %vm76 = vcmask 195584
    %v78 = vsel %vm76, %v60, 0
    %vm80 = vcmask 1043456
    %v82 = vsel %vm80, %v72, 0
    %v85 = vsel %vm80, %v73, 0
    %87 = vmatpush.bf16.msra.mxu0 0
    %88 = vmatpush.bf16.msra.mxu0 0
    %89 = vmatpush.bf16.msra.mxu0 0
    %90 = vmatpush.bf16.msra.mxu0 0
    %91 = vmatpush.bf16.msra.mxu0 0
    %92 = vmatpush.bf16.msra.mxu0 0
    %93 = vmatpush.bf16.msra.mxu0 %v82
    %94 = vmatpush.bf16.msra.mxu0 %v70
    %95 = vmatmul.bf16.gmra.mxu0 %v78
    %v96 = vpop.f32.mrf.mxu0
    %v97 = vadd.f32 %v52, %v96
    %v98 = vpop.f32.mrf.mxu0
    %v99 = vadd.f32 %v52, %v98
    %100 = vdwg.mxu0
    %101 = vmatpush.bf16.msra.mxu0 0
    %102 = vmatpush.bf16.msra.mxu0 0
    %103 = vmatpush.bf16.msra.mxu0 0
    %104 = vmatpush.bf16.msra.mxu0 0
    %105 = vmatpush.bf16.msra.mxu0 0
    %106 = vmatpush.bf16.msra.mxu0 0
    %107 = vmatpush.bf16.msra.mxu0 %v85
    %108 = vmatpush.bf16.msra.mxu0 %v71
    %109 = vmatmul.bf16.gmra.mxu0 %v78
    %v110 = vpop.f32.mrf.mxu0
    %v111 = vadd.f32 %v53, %v110
    %v112 = vpop.f32.mrf.mxu0
    %v113 = vadd.f32 %v53, %v112
    %114 = vdwg.mxu0
    %v115 = vmax.f32 %v97, 0.0
    %v116 = vmax.f32 %v111, 0.0
    %v117 = vmax.f32 %v99, 0.0
    %v118 = vmax.f32 %v113, 0.0
    %v119 = vpack.c.bf16 %v117, %v115
    %v120 = vpack.c.bf16 %v118, %v116
    %v121 = vld [vmem:[#allocation3] sm:$0xff]
    %v122 = vld [vmem:[#allocation3 + $0x8] sm:$0xff]
    %v123 = vld [vmem:[#allocation3 + $0x10] sm:$0xff]
    %v124 = vld [vmem:[#allocation3 + $0x18] sm:$0xff]
    %v125 = vld [vmem:[#allocation3 + $0x20] sm:$0xff]
    %v126 = vld [vmem:[#allocation3 + $0x28] sm:$0xff]
    %v127 = vld [vmem:[#allocation3 + $0x30] sm:$0xff]
    %v128 = vld [vmem:[#allocation3 + $0x38] sm:$0xff]
    %v129 = vld [vmem:[#allocation3 + $0x40] sm:$0xff]
    %v130 = vld [vmem:[#allocation3 + $0x48] sm:$0xff]
    %v131 = vld [vmem:[#allocation3 + $0x50] sm:$0xff]
    %v132 = vld [vmem:[#allocation3 + $0x58] sm:$0xff]
    %v133 = vld [vmem:[#allocation3 + $0x60] sm:$0xff]
    %v134 = vld [vmem:[#allocation3 + $0x68] sm:$0xff]
    %v135 = vld [vmem:[#allocation3 + $0x70] sm:$0xff]
    %v136 = vld [vmem:[#allocation3 + $0x78] sm:$0xff]
    %v137 = vld [vmem:[#allocation3 + $0x80] sm:$0xff]
    %v138 = vld [vmem:[#allocation3 + $0x88] sm:$0xff]
    %v139 = vld [vmem:[#allocation3 + $0x90] sm:$0xff]
    %v140 = vld [vmem:[#allocation3 + $0x98] sm:$0xff]
    %v141 = vld [vmem:[#allocation3 + $0xa0] sm:$0xff]
    %v142 = vld [vmem:[#allocation3 + $0xa8] sm:$0xff]
    %v143 = vld [vmem:[#allocation3 + $0xb0] sm:$0xff]
    %v144 = vld [vmem:[#allocation3 + $0xb8] sm:$0xff]
    %v145 = vld [vmem:[#allocation3 + $0xc0] sm:$0xff]
    %v146 = vld [vmem:[#allocation3 + $0xc8] sm:$0xff]
    %v147 = vld [vmem:[#allocation3 + $0xd0] sm:$0xff]
    %v148 = vld [vmem:[#allocation3 + $0xd8] sm:$0xff]
    %v149 = vld [vmem:[#allocation3 + $0xe0] sm:$0xff]
    %v150 = vld [vmem:[#allocation3 + $0xe8] sm:$0xff]
    %v151 = vld [vmem:[#allocation3 + $0xf0] sm:$0xff]
    %v152 = vld [vmem:[#allocation3 + $0xf8] sm:$0xff]
    %v153 = vld [vmem:[%s4] sm:$0x3]
    %v155 = vperm.slane %v153, 0
    %v156 = vperm.slane %v153, 1
    %v191 = vunpack.c.l.b16 %v121
    %v192 = vunpack.c.h.b16 %v121
    %v193 = vunpack.c.l.b16 %v122
    %v194 = vunpack.c.h.b16 %v122
    %v195 = vunpack.c.l.b16 %v123
    %v196 = vunpack.c.h.b16 %v123
    %v197 = vunpack.c.l.b16 %v124
    %v198 = vunpack.c.h.b16 %v124
    %v199 = vunpack.c.l.b16 %v125
    %v200 = vunpack.c.h.b16 %v125
    %v201 = vunpack.c.l.b16 %v126
    %v202 = vunpack.c.h.b16 %v126
    %v203 = vunpack.c.l.b16 %v127
    %v204 = vunpack.c.h.b16 %v127
    %v205 = vunpack.c.l.b16 %v128
    %v206 = vunpack.c.h.b16 %v128
    %v207 = vunpack.c.l.b16 %v129
    %v208 = vunpack.c.h.b16 %v129
    %v209 = vunpack.c.l.b16 %v130
    %v210 = vunpack.c.h.b16 %v130
    %v211 = vunpack.c.l.b16 %v131
    %v212 = vunpack.c.h.b16 %v131
    %v213 = vunpack.c.l.b16 %v132
    %v214 = vunpack.c.h.b16 %v132
    %v215 = vunpack.c.l.b16 %v133
    %v216 = vunpack.c.h.b16 %v133
    %v217 = vunpack.c.l.b16 %v134
    %v218 = vunpack.c.h.b16 %v134
    %v219 = vunpack.c.l.b16 %v135
    %v220 = vunpack.c.h.b16 %v135
    %v221 = vunpack.c.l.b16 %v136
    %v222 = vunpack.c.h.b16 %v136
    %v223 = vunpack.c.l.b16 %v137
    %v224 = vunpack.c.h.b16 %v137
    %v225 = vunpack.c.l.b16 %v138
    %v226 = vunpack.c.h.b16 %v138
    %v227 = vunpack.c.l.b16 %v139
    %v228 = vunpack.c.h.b16 %v139
    %v229 = vunpack.c.l.b16 %v140
    %v230 = vunpack.c.h.b16 %v140
    %v231 = vunpack.c.l.b16 %v141
    %v232 = vunpack.c.h.b16 %v141
    %v233 = vunpack.c.l.b16 %v142
    %v234 = vunpack.c.h.b16 %v142
    %v235 = vunpack.c.l.b16 %v143
    %v236 = vunpack.c.h.b16 %v143
    %v237 = vunpack.c.l.b16 %v144
    %v238 = vunpack.c.h.b16 %v144
    %v239 = vunpack.c.l.b16 %v145
    %v240 = vunpack.c.h.b16 %v145
    %v241 = vunpack.c.l.b16 %v146
    %v242 = vunpack.c.h.b16 %v146
    %v243 = vunpack.c.l.b16 %v147
    %v244 = vunpack.c.h.b16 %v147
    %v245 = vunpack.c.l.b16 %v148
    %v246 = vunpack.c.h.b16 %v148
    %v247 = vunpack.c.l.b16 %v149
    %v248 = vunpack.c.h.b16 %v149
    %v249 = vunpack.c.l.b16 %v150
    %v250 = vunpack.c.h.b16 %v150
    %v251 = vunpack.c.l.b16 %v151
    %v252 = vunpack.c.h.b16 %v151
    %v253 = vunpack.c.l.b16 %v152
    %v254 = vunpack.c.h.b16 %v152
    %v255 = vpack.c.b16 %v193, %v191
    %v256 = vpack.c.b16 %v194, %v192
    %v257 = vpack.c.b16 %v197, %v195
    %v258 = vpack.c.b16 %v198, %v196
    %v259 = vpack.c.b16 %v201, %v199
    %v260 = vpack.c.b16 %v202, %v200
    %v261 = vpack.c.b16 %v205, %v203
    %v262 = vpack.c.b16 %v206, %v204
    %v263 = vpack.c.b16 %v209, %v207
    %v264 = vpack.c.b16 %v210, %v208
    %v265 = vpack.c.b16 %v213, %v211
    %v266 = vpack.c.b16 %v214, %v212
    %v267 = vpack.c.b16 %v217, %v215
    %v268 = vpack.c.b16 %v218, %v216
    %v269 = vpack.c.b16 %v221, %v219
    %v270 = vpack.c.b16 %v222, %v220
    %v271 = vpack.c.b16 %v225, %v223
    %v272 = vpack.c.b16 %v226, %v224
    %v273 = vpack.c.b16 %v229, %v227
    %v274 = vpack.c.b16 %v230, %v228
    %v275 = vpack.c.b16 %v233, %v231
    %v276 = vpack.c.b16 %v234, %v232
    %v277 = vpack.c.b16 %v237, %v235
    %v278 = vpack.c.b16 %v238, %v236
    %v279 = vpack.c.b16 %v241, %v239
    %v280 = vpack.c.b16 %v242, %v240
    %v281 = vpack.c.b16 %v245, %v243
    %v282 = vpack.c.b16 %v246, %v244
    %v283 = vpack.c.b16 %v249, %v247
    %v284 = vpack.c.b16 %v250, %v248
    %v285 = vpack.c.b16 %v253, %v251
    %v286 = vpack.c.b16 %v254, %v252
    %319 = vmatpush.bf16.msra.mxu0 %v269
    %320 = vmatpush.bf16.msra.mxu0 %v267
    %321 = vmatpush.bf16.msra.mxu0 %v265
    %322 = vmatpush.bf16.msra.mxu0 %v263
    %323 = vmatpush.bf16.msra.mxu0 %v261
    %324 = vmatpush.bf16.msra.mxu0 %v259
    %325 = vmatpush.bf16.msra.mxu0 %v257
    %326 = vmatpush.bf16.msra.mxu0 %v255
    %327 = vmatmul.bf16.gmra.mxu0 %v119
    %v328 = vpop.f32.mrf.mxu0
    %v329 = vadd.f32 %v155, %v328
    %v330 = vpop.f32.mrf.mxu0
    %v331 = vadd.f32 %v155, %v330
    %332 = vdwg.mxu0
    %333 = vmatpush.bf16.msra.mxu0 %v285
    %334 = vmatpush.bf16.msra.mxu0 %v283
    %335 = vmatpush.bf16.msra.mxu0 %v281
    %336 = vmatpush.bf16.msra.mxu0 %v279
    %337 = vmatpush.bf16.msra.mxu0 %v277
    %338 = vmatpush.bf16.msra.mxu0 %v275
    %339 = vmatpush.bf16.msra.mxu0 %v273
    %340 = vmatpush.bf16.msra.mxu0 %v271
    %341 = vmatmul.bf16.gmra.mxu0 %v120
    %v342 = vpop.f32.mrf.mxu0
    %v343 = vadd.f32 %v329, %v342
    %v344 = vpop.f32.mrf.mxu0
    %v345 = vadd.f32 %v331, %v344
    %346 = vdwg.mxu0
    %347 = vmatpush.bf16.msra.mxu0 %v270
    %348 = vmatpush.bf16.msra.mxu0 %v268
    %349 = vmatpush.bf16.msra.mxu0 %v266
    %350 = vmatpush.bf16.msra.mxu0 %v264
    %351 = vmatpush.bf16.msra.mxu0 %v262
    %352 = vmatpush.bf16.msra.mxu0 %v260
    %353 = vmatpush.bf16.msra.mxu0 %v258
    %354 = vmatpush.bf16.msra.mxu0 %v256
    %355 = vmatmul.bf16.gmra.mxu0 %v119
    %v356 = vpop.f32.mrf.mxu0
    %v357 = vadd.f32 %v156, %v356
    %v358 = vpop.f32.mrf.mxu0
    %v359 = vadd.f32 %v156, %v358
    %360 = vdwg.mxu0
    %361 = vmatpush.bf16.msra.mxu0 %v286
    %362 = vmatpush.bf16.msra.mxu0 %v284
    %363 = vmatpush.bf16.msra.mxu0 %v282
    %364 = vmatpush.bf16.msra.mxu0 %v280
    %365 = vmatpush.bf16.msra.mxu0 %v278
    %366 = vmatpush.bf16.msra.mxu0 %v276
    %367 = vmatpush.bf16.msra.mxu0 %v274
    %368 = vmatpush.bf16.msra.mxu0 %v272
    %369 = vmatmul.bf16.gmra.mxu0 %v120
    %v370 = vpop.f32.mrf.mxu0
    %v371 = vadd.f32 %v357, %v370
    %v372 = vpop.f32.mrf.mxu0
    %v373 = vadd.f32 %v359, %v372
    %374 = vdwg.mxu0
    %v375 = vmax.f32 %v343, 0.0
    %v376 = vmax.f32 %v371, 0.0
    %v377 = vmax.f32 %v345, 0.0
    %v378 = vmax.f32 %v373, 0.0
    %v379 = vpack.c.bf16 %v377, %v375
    %v380 = vpack.c.bf16 %v378, %v376
    %v381 = vld [vmem:[%s5] sm:$0xf]
    %v382 = vld [vmem:[%s5 + $0x4] sm:$0xf]
    %v383 = vld [vmem:[%s5 + $0x8] sm:$0xf]
    %v384 = vld [vmem:[%s5 + $0xc] sm:$0xf]
    %v385 = vld [vmem:[%s5 + $0x10] sm:$0xf]
    %v386 = vld [vmem:[%s5 + $0x14] sm:$0xf]
    %v387 = vld [vmem:[%s5 + $0x18] sm:$0xf]
    %v388 = vld [vmem:[%s5 + $0x1c] sm:$0xf]
    %v389 = vld [vmem:[%s5 + $0x20] sm:$0xf]
    %v390 = vld [vmem:[%s5 + $0x24] sm:$0xf]
    %v391 = vld [vmem:[%s5 + $0x28] sm:$0xf]
    %v392 = vld [vmem:[%s5 + $0x2c] sm:$0xf]
    %v393 = vld [vmem:[%s5 + $0x30] sm:$0xf]
    %v394 = vld [vmem:[%s5 + $0x34] sm:$0xf]
    %v395 = vld [vmem:[%s5 + $0x38] sm:$0xf]
    %v396 = vld [vmem:[%s5 + $0x3c] sm:$0xf]
    %v397 = vld [vmem:[%s5 + $0x40] sm:$0xf]
    %v398 = vld [vmem:[%s5 + $0x44] sm:$0xf]
    %v399 = vld [vmem:[%s5 + $0x48] sm:$0xf]
    %v400 = vld [vmem:[%s5 + $0x4c] sm:$0xf]
    %v401 = vld [vmem:[%s5 + $0x50] sm:$0xf]
    %v402 = vld [vmem:[%s5 + $0x54] sm:$0xf]
    %v403 = vld [vmem:[%s5 + $0x58] sm:$0xf]
    %v404 = vld [vmem:[%s5 + $0x5c] sm:$0xf]
    %v405 = vld [vmem:[%s5 + $0x60] sm:$0xf]
    %v406 = vld [vmem:[%s5 + $0x64] sm:$0xf]
    %v407 = vld [vmem:[%s5 + $0x68] sm:$0xf]
    %v408 = vld [vmem:[%s5 + $0x6c] sm:$0xf]
    %v409 = vld [vmem:[%s5 + $0x70] sm:$0xf]
    %v410 = vld [vmem:[%s5 + $0x74] sm:$0xf]
    %v411 = vld [vmem:[%s5 + $0x78] sm:$0xf]
    %v412 = vld [vmem:[%s5 + $0x7c] sm:$0xf]
    %v413 = vld [vmem:[#allocation2] sm:$0x1]
    %v415 = vperm.slane %v413, 0
    %v449 = vunpack.c.l.b16 %v381
    %v450 = vunpack.c.l.b16 %v382
    %v451 = vunpack.c.l.b16 %v383
    %v452 = vunpack.c.l.b16 %v384
    %v453 = vunpack.c.l.b16 %v385
    %v454 = vunpack.c.l.b16 %v386
    %v455 = vunpack.c.l.b16 %v387
    %v456 = vunpack.c.l.b16 %v388
    %v457 = vunpack.c.l.b16 %v389
    %v458 = vunpack.c.l.b16 %v390
    %v459 = vunpack.c.l.b16 %v391
    %v460 = vunpack.c.l.b16 %v392
    %v461 = vunpack.c.l.b16 %v393
    %v462 = vunpack.c.l.b16 %v394
    %v463 = vunpack.c.l.b16 %v395
    %v464 = vunpack.c.l.b16 %v396
    %v465 = vunpack.c.l.b16 %v397
    %v466 = vunpack.c.l.b16 %v398
    %v467 = vunpack.c.l.b16 %v399
    %v468 = vunpack.c.l.b16 %v400
    %v469 = vunpack.c.l.b16 %v401
    %v470 = vunpack.c.l.b16 %v402
    %v471 = vunpack.c.l.b16 %v403
    %v472 = vunpack.c.l.b16 %v404
    %v473 = vunpack.c.l.b16 %v405
    %v474 = vunpack.c.l.b16 %v406
    %v475 = vunpack.c.l.b16 %v407
    %v476 = vunpack.c.l.b16 %v408
    %v477 = vunpack.c.l.b16 %v409
    %v478 = vunpack.c.l.b16 %v410
    %v479 = vunpack.c.l.b16 %v411
    %v480 = vunpack.c.l.b16 %v412
    %v481 = vpack.c.b16 %v450, %v449
    %v482 = vpack.c.b16 %v452, %v451
    %v483 = vpack.c.b16 %v454, %v453
    %v484 = vpack.c.b16 %v456, %v455
    %v485 = vpack.c.b16 %v458, %v457
    %v486 = vpack.c.b16 %v460, %v459
    %v487 = vpack.c.b16 %v462, %v461
    %v488 = vpack.c.b16 %v464, %v463
    %v489 = vpack.c.b16 %v466, %v465
    %v490 = vpack.c.b16 %v468, %v467
    %v491 = vpack.c.b16 %v470, %v469
    %v492 = vpack.c.b16 %v472, %v471
    %v493 = vpack.c.b16 %v474, %v473
    %v494 = vpack.c.b16 %v476, %v475
    %v495 = vpack.c.b16 %v478, %v477
    %v496 = vpack.c.b16 %v480, %v479
    %513 = vmatpush.bf16.msra.mxu0 %v488
    %514 = vmatpush.bf16.msra.mxu0 %v487
    %515 = vmatpush.bf16.msra.mxu0 %v486
    %516 = vmatpush.bf16.msra.mxu0 %v485
    %517 = vmatpush.bf16.msra.mxu0 %v484
    %518 = vmatpush.bf16.msra.mxu0 %v483
    %519 = vmatpush.bf16.msra.mxu0 %v482
    %520 = vmatpush.bf16.msra.mxu0 %v481
    %521 = vmatmul.bf16.gmra.mxu0 %v379
    %v522 = vpop.f32.mrf.mxu0
    %v523 = vadd.f32 %v415, %v522
    %v524 = vpop.f32.mrf.mxu0
    %v525 = vadd.f32 %v415, %v524
    %526 = vdwg.mxu0
    %527 = vmatpush.bf16.msra.mxu0 %v496
    %528 = vmatpush.bf16.msra.mxu0 %v495
    %529 = vmatpush.bf16.msra.mxu0 %v494
    %530 = vmatpush.bf16.msra.mxu0 %v493
    %531 = vmatpush.bf16.msra.mxu0 %v492
    %532 = vmatpush.bf16.msra.mxu0 %v491
    %533 = vmatpush.bf16.msra.mxu0 %v490
    %534 = vmatpush.bf16.msra.mxu0 %v489
    %535 = vmatmul.bf16.gmra.mxu0 %v380
    %v536 = vpop.f32.mrf.mxu0
    %v537 = vadd.f32 %v523, %v536
    %v538 = vpop.f32.mrf.mxu0
    %v539 = vadd.f32 %v525, %v538
    %540 = vdwg.mxu0
    %vm541 = vcmask 7168
    %542 = vst.msk [vmem:[%s7] sm:$0xff] %vm541, %v537
    %543 = vst.msk [vmem:[%s7 + $0x8] sm:$0xff] %vm541, %v539
    // Predicated region
    $region34: #{_q_single.1} parent=1 // pred_check
      _
    $region35: #{_q_single.1} parent=1 // pred_check_branch
      %545 = sbr.rel (0) target = $region37
    $region36: #{_q_single.1} parent=1 // pred_region
      _
    $region37: #{_q_single.1} parent=1 // pred_fallthru
      _
    // Predicated region
    $region38: #{_q_single.1} parent=1 // pred_check
      _
    $region39: #{_q_single.1} parent=1 // pred_check_branch
      %547 = sbr.rel (0) target = $region41
    $region40: #{_q_single.1} parent=1 // pred_region
      _
    $region41: #{_q_single.1} parent=1 // pred_fallthru
      _
    %548 = vsyncpa [#allocation4], 1

</llo_original>
